<compile_context>
chip_gen: v6e
topology: v6e:2x2x1
jax: 0.10.0
libtpu: 0.0.40
codegen_flags: <defaults>
</compile_context>

<pallas_src>
import functools

import jax
import jax.numpy as jnp
from jax import lax
from jax.experimental import pallas as pl
from jax.experimental.pallas import tpu as pltpu


PCOLS = 128  # lane width of the packed-parameter operand


def _round_up(v, m):
    return ((v + m - 1) // m) * m


def _gelu_exact(x):
    # PyTorch nn.GELU() default is the exact (erf-based) formulation.
    return 0.5 * x * (1.0 + lax.erf(x * (1.0 / jnp.sqrt(2.0).astype(x.dtype))))


# --------------------------------------------------------------------------
# Kernel
# --------------------------------------------------------------------------
def _make_kernel(C, HW, Hd, off_w2, off_b1):
    inv_hw = 1.0 / float(HW)

    def kernel(x_ref, p_ref, o_ref):
        xn = x_ref[0]                                  # (C, HW), C on sublanes

        # ---- Packed parameters: full-lane, 8-aligned sublane slices ----
        w1t = p_ref[0:C, :]                            # (C, 128): W1^T in lanes 0:Hd
        w2a = p_ref[off_w2:off_w2 + C, :]              # (C, 128): W2 in lanes 0:Hd, b2 in lane Hd
        b1r = p_ref[off_b1:off_b1 + 8, :][0:1, :]      # (1, 128): b1 in lanes 0:Hd

        # ---- Pooling: lane reduce over spatial, C stays on sublanes ----
        avg = jnp.sum(xn, axis=1, keepdims=True) * inv_hw   # (C, 1)
        mx = jnp.max(xn, axis=1, keepdims=True)             # (C, 1)

        # ---- Layer 1 (VPU mult + XLU sublane reduce), no MXU ----
        # h[j] = sum_c W1[j,c] * pool[c]  ==  sum over sublanes of (W1^T * pool_col)
        h_avg = jnp.sum(w1t * avg, axis=0, keepdims=True) + b1r   # (1, 128)
        h_max = jnp.sum(w1t * mx, axis=0, keepdims=True) + b1r    # (1, 128)
        # Lanes >= Hd are exactly 0 here (zero padding + gelu(0) == 0).
        h_sum = _gelu_exact(h_avg) + _gelu_exact(h_max)           # (1, 128)

        # ---- Layer 2 (VPU mult + XLU lane reduce); b2 folded as column Hd ----
        # out = W2 @ h_sum + 2*b2  ->  lane Hd of h_aug carries the constant 2.
        lane = lax.broadcasted_iota(jnp.int32, h_sum.shape, 1)
        h_aug = jnp.where(lane == Hd, jnp.float32(2.0), h_sum)    # (1, 128)
        out_col = jnp.sum(w2a * h_aug, axis=1, keepdims=True)     # (C, 1)

        # ---- Gate + rescale (broadcast the (C,1) column over lanes) ----
        gate = jax.nn.sigmoid(out_col)                 # (C, 1)
        o_ref[0] = xn * gate                           # (C, HW)

    return kernel


# --------------------------------------------------------------------------
# Parameter packing (done ONCE, outside the per-call hot path)
# --------------------------------------------------------------------------
def _pack_params(W1, b1, W2, b2):
    """W1: (Hd, C), b1: (Hd,), W2: (C, Hd), b2: (C,)  (PyTorch nn.Linear layout)."""
    Hd, C = W1.shape
    assert Hd >= 1, "reduction_ratio too large: hidden width must be >= 1"
    assert W2.shape == (C, Hd) and b1.shape == (Hd,) and b2.shape == (C,)
    assert Hd + 1 <= PCOLS, "hidden width (+1 bias column) must fit in 128 lanes"

    off_w2 = _round_up(C, 8)
    off_b1 = off_w2 + _round_up(C, 8)
    rows = off_b1 + 8

    p = jnp.zeros((rows, PCOLS), jnp.float32)
    p = p.at[0:C, 0:Hd].set(W1.T.astype(jnp.float32))             # W1^T
    p = p.at[off_w2:off_w2 + C, 0:Hd].set(W2.astype(jnp.float32)) # W2
    p = p.at[off_w2:off_w2 + C, Hd].set(b2.astype(jnp.float32))   # b2 (extra column)
    p = p.at[off_b1, 0:Hd].set(b1.astype(jnp.float32))            # b1 (lane row)
    return p, (C, Hd, off_w2, off_b1, rows)


# --------------------------------------------------------------------------
# pallas_call wrapper
# --------------------------------------------------------------------------
def _channel_attention_impl(x_nchw, p, *, Hd, off_w2, off_b1, rows):
    N, C, H, W = x_nchw.shape
    HW = H * W
    x_flat = x_nchw.reshape(N, C, HW)

    kernel = _make_kernel(C, HW, Hd, off_w2, off_b1)

    # Advisory cost estimate: cheap, memory-bound custom call.
    mlp_flops = N * 2 * (2 * C * Hd + 2 * Hd * C)      # two matvecs x (avg,max)
    pool_flops = 2 * N * C * HW                        # avg + max reductions
    rescale_flops = N * C * HW                         # elementwise gate
    cost = pl.CostEstimate(
        flops=int(mlp_flops + pool_flops + rescale_flops),
        transcendentals=int(N * (2 * Hd + C)),         # erf + sigmoid
        bytes_accessed=int(2 * N * C * HW * 4 + rows * PCOLS * 4),
    )

    out = pl.pallas_call(
        kernel,
        out_shape=jax.ShapeDtypeStruct((N, C, HW), jnp.float32),
        grid_spec=pltpu.PrefetchScalarGridSpec(
            num_scalar_prefetch=0,
            grid=(N,),                                         # one step per batch element
            in_specs=[
                pl.BlockSpec((1, C, HW), lambda n: (n, 0, 0)),     # x (per-batch block)
                pl.BlockSpec((rows, PCOLS), lambda n: (0, 0)),     # packed params (resident)
            ],
            out_specs=pl.BlockSpec((1, C, HW), lambda n: (n, 0, 0)),
        ),
        compiler_params=pltpu.CompilerParams(
            dimension_semantics=("parallel",)),                # megacore sharding on v7x
        cost_estimate=cost,
    )(x_flat, p)
    return out.reshape(N, C, H, W)


def make_channel_attention(W1, b1, W2, b2):
    """Pack parameters once and return a jitted callable x -> ChannelAttention(x)."""
    p, (C, Hd, off_w2, off_b1, rows) = _pack_params(W1, b1, W2, b2)

    @jax.jit
    def apply(x):
        assert x.shape[1] == C, "channel mismatch between x and the MLP weights"
        return _channel_attention_impl(
            x, p, Hd=Hd, off_w2=off_w2, off_b1=off_b1, rows=rows)

    return apply


# --------------------------------------------------------------------------
# Pure-JAX reference (mirrors the PyTorch forward, row form)
# --------------------------------------------------------------------------
def channel_attention_ref(x, W1, b1, W2, b2):
    avg_pool = jnp.mean(x, axis=(2, 3))                 # (N, C)
    max_pool = jnp.max(x, axis=(2, 3))                  # (N, C)

    def mlp(v):
        h = _gelu_exact(v @ W1.T + b1)
        return h @ W2.T + b2

    out = mlp(avg_pool) + mlp(max_pool)
    scale = jax.nn.sigmoid(out)[:, :, None, None]
    return x * scale


if __name__ == "__main__":
    key = jax.random.PRNGKey(0)

    # Shapes consistent with the module: in_channels=32, reduction_ratio=16.
    N, C, H, W = 2, 32, 16, 16
    reduction = 16
    Hd = C // reduction  # hidden width of the MLP (= 2)

    kx, kw1, kb1, kw2, kb2 = jax.random.split(key, 5)
    x = jax.random.normal(kx, (N, C, H, W), dtype=jnp.float32)

    # PyTorch nn.Linear weight layout: (out_features, in_features).
    W1 = jax.random.normal(kw1, (Hd, C), dtype=jnp.float32) * 0.1   # Linear(C -> Hd)
    b1 = jax.random.normal(kb1, (Hd,), dtype=jnp.float32) * 0.1
    W2 = jax.random.normal(kw2, (C, Hd), dtype=jnp.float32) * 0.1   # Linear(Hd -> C)
    b2 = jax.random.normal(kb2, (C,), dtype=jnp.float32) * 0.1

    # Params packed once ("module init"), not on the per-call hot path.
    channel_attention = make_channel_attention(W1, b1, W2, b2)

    y = channel_attention(x)
    y = jax.block_until_ready(y)

    y_ref = channel_attention_ref(x, W1, b1, W2, b2)
    assert y.shape == (N, C, H, W)
    assert jnp.allclose(y, y_ref, atol=1e-5, rtol=1e-5), "mismatch vs reference"

    print("KERNEL_OK")
</pallas_src>

<mosaic_0001>
module attributes {stable_mosaic.version = 11 : i64} {
  func.func @kernel(%arg0: i32, %arg1: memref<1x32x256xf32, #tpu.memory_space<vmem>>, %arg2: memref<72x128xf32, #tpu.memory_space<vmem>>, %arg3: memref<1x32x256xf32, #tpu.memory_space<vmem>>) attributes {dimension_semantics = [#tpu.dimension_semantics<parallel>], iteration_bounds = array<i64: 2>, scalar_prefetch = 0 : i64, scratch_operands = 0 : i64, tpu.core_type = #tpu.core_type<tc>, window_params = [{transform_indices = @transform_0, window_bounds = array<i64: 1, 32, 256>}, {pipeline_mode = #tpu.pipeline_mode<synchronous>, transform_indices = @transform_1, window_bounds = array<i64: 72, 128>}, {transform_indices = @transform_2, window_bounds = array<i64: 1, 32, 256>}]} {
    %c0 = arith.constant 0 : index
    %c0_0 = arith.constant 0 : index
    %c0_1 = arith.constant 0 : index
    %0 = vector.load %arg1[%c0, %c0_0, %c0_1] : memref<1x32x256xf32, #tpu.memory_space<vmem>>, vector<1x32x256xf32>
    %1 = vector.shape_cast %0 : vector<1x32x256xf32> to vector<32x256xf32>
    %c0_2 = arith.constant 0 : index
    %c0_3 = arith.constant 0 : index
    %2 = vector.load %arg2[%c0_2, %c0_3] : memref<72x128xf32, #tpu.memory_space<vmem>>, vector<32x128xf32>
    %c32 = arith.constant 32 : index
    %c0_4 = arith.constant 0 : index
    %3 = vector.load %arg2[%c32, %c0_4] : memref<72x128xf32, #tpu.memory_space<vmem>>, vector<32x128xf32>
    %c64 = arith.constant 64 : index
    %c0_5 = arith.constant 0 : index
    %4 = vector.load %arg2[%c64, %c0_5] : memref<72x128xf32, #tpu.memory_space<vmem>>, vector<8x128xf32>
    %5 = vector.extract_strided_slice %4 {offsets = [0, 0], sizes = [1, 128], strides = [1, 1]} : vector<8x128xf32> to vector<1x128xf32>
    %cst = arith.constant dense<0.000000e+00> : vector<32xf32>
    %6 = vector.multi_reduction <add>, %1, %cst [1] : vector<32x256xf32> to vector<32xf32>
    %7 = vector.shape_cast %6 : vector<32xf32> to vector<32x1xf32>
    %cst_6 = arith.constant 3.906250e-03 : f32
    %8 = vector.broadcast %cst_6 : f32 to vector<32x1xf32>
    %9 = arith.mulf %7, %8 : vector<32x1xf32>
    %cst_7 = arith.constant dense<0xFF800000> : vector<32xf32>
    %10 = vector.multi_reduction <maximumf>, %1, %cst_7 [1] : vector<32x256xf32> to vector<32xf32>
    %11 = vector.shape_cast %10 : vector<32xf32> to vector<32x1xf32>
    %12 = vector.broadcast %9 : vector<32x1xf32> to vector<32x128xf32>
    %13 = arith.mulf %2, %12 : vector<32x128xf32>
    %cst_8 = arith.constant dense<0.000000e+00> : vector<128xf32>
    %14 = vector.multi_reduction <add>, %13, %cst_8 [0] : vector<32x128xf32> to vector<128xf32>
    %15 = vector.shape_cast %14 : vector<128xf32> to vector<1x128xf32>
    %16 = arith.addf %15, %5 : vector<1x128xf32>
    %17 = vector.broadcast %11 : vector<32x1xf32> to vector<32x128xf32>
    %18 = arith.mulf %2, %17 : vector<32x128xf32>
    %cst_9 = arith.constant dense<0.000000e+00> : vector<128xf32>
    %19 = vector.multi_reduction <add>, %18, %cst_9 [0] : vector<32x128xf32> to vector<128xf32>
    %20 = vector.shape_cast %19 : vector<128xf32> to vector<1x128xf32>
    %21 = arith.addf %20, %5 : vector<1x128xf32>
    %cst_10 = arith.constant 5.000000e-01 : f32
    %22 = vector.broadcast %cst_10 : f32 to vector<1x128xf32>
    %23 = arith.mulf %22, %16 : vector<1x128xf32>
    %cst_11 = arith.constant 2.000000e+00 : f32
    %24 = math.sqrt %cst_11 : f32
    %cst_12 = arith.constant 1.000000e+00 : f32
    %25 = arith.divf %cst_12, %24 : f32
    %26 = vector.broadcast %25 : f32 to vector<1x128xf32>
    %27 = arith.mulf %16, %26 : vector<1x128xf32>
    %28 = math.erf %27 : vector<1x128xf32>
    %cst_13 = arith.constant 1.000000e+00 : f32
    %29 = vector.broadcast %cst_13 : f32 to vector<1x128xf32>
    %30 = arith.addf %29, %28 : vector<1x128xf32>
    %31 = arith.mulf %23, %30 : vector<1x128xf32>
    %cst_14 = arith.constant 5.000000e-01 : f32
    %32 = vector.broadcast %cst_14 : f32 to vector<1x128xf32>
    %33 = arith.mulf %32, %21 : vector<1x128xf32>
    %cst_15 = arith.constant 2.000000e+00 : f32
    %34 = math.sqrt %cst_15 : f32
    %cst_16 = arith.constant 1.000000e+00 : f32
    %35 = arith.divf %cst_16, %34 : f32
    %36 = vector.broadcast %35 : f32 to vector<1x128xf32>
    %37 = arith.mulf %21, %36 : vector<1x128xf32>
    %38 = math.erf %37 : vector<1x128xf32>
    %cst_17 = arith.constant 1.000000e+00 : f32
    %39 = vector.broadcast %cst_17 : f32 to vector<1x128xf32>
    %40 = arith.addf %39, %38 : vector<1x128xf32>
    %41 = arith.mulf %33, %40 : vector<1x128xf32>
    %42 = arith.addf %31, %41 : vector<1x128xf32>
    %43 = tpu.iota {dimensions = array<i32: 1>} : vector<1x128xi32>
    %c2_i32 = arith.constant 2 : i32
    %44 = vector.broadcast %c2_i32 : i32 to vector<1x128xi32>
    %45 = arith.cmpi eq, %43, %44 : vector<1x128xi32>
    %cst_18 = arith.constant 2.000000e+00 : f32
    %46 = vector.broadcast %cst_18 : f32 to vector<1x128xf32>
    %47 = arith.select %45, %46, %42 : vector<1x128xi1>, vector<1x128xf32>
    %48 = vector.broadcast %47 : vector<1x128xf32> to vector<32x128xf32>
    %49 = arith.mulf %3, %48 : vector<32x128xf32>
    %cst_19 = arith.constant dense<0.000000e+00> : vector<32xf32>
    %50 = vector.multi_reduction <add>, %49, %cst_19 [1] : vector<32x128xf32> to vector<32xf32>
    %51 = vector.shape_cast %50 : vector<32xf32> to vector<32x1xf32>
    %52 = arith.negf %51 : vector<32x1xf32>
    %53 = math.exp %52 : vector<32x1xf32>
    %cst_20 = arith.constant 1.000000e+00 : f32
    %54 = vector.broadcast %cst_20 : f32 to vector<32x1xf32>
    %55 = arith.addf %54, %53 : vector<32x1xf32>
    %56 = arith.divf %54, %55 : vector<32x1xf32>
    %57 = vector.broadcast %56 : vector<32x1xf32> to vector<32x256xf32>
    %58 = arith.mulf %1, %57 : vector<32x256xf32>
    %c0_21 = arith.constant 0 : index
    %c0_22 = arith.constant 0 : index
    %c0_23 = arith.constant 0 : index
    %59 = vector.load %arg3[%c0_21, %c0_22, %c0_23] : memref<1x32x256xf32, #tpu.memory_space<vmem>>, vector<1x32x256xf32>
    %60 = vector.shape_cast %59 : vector<1x32x256xf32> to vector<32x256xf32>
    %61 = vector.shape_cast %58 : vector<32x256xf32> to vector<1x32x256xf32>
    tpu.vector_store %arg3[%c0_21, %c0_22, %c0_23], %61 {strides = array<i32>} : memref<1x32x256xf32, #tpu.memory_space<vmem>>, vector<1x32x256xf32>,
    return
  }
  func.func @transform_0(%arg0: i32) -> (i32, i32, i32) {
    %c0_i32 = arith.constant 0 : i32
    %c0_i32_0 = arith.constant 0 : i32
    %c0_i32_1 = arith.constant 0 : i32
    return %arg0, %c0_i32, %c0_i32_0 : i32, i32, i32
  }
  func.func @transform_1(%arg0: i32) -> (i32, i32) {
    %c0_i32 = arith.constant 0 : i32
    %c0_i32_0 = arith.constant 0 : i32
    %c0_i32_1 = arith.constant 0 : i32
    return %c0_i32, %c0_i32_0 : i32, i32
  }
  func.func @transform_2(%arg0: i32) -> (i32, i32, i32) {
    %c0_i32 = arith.constant 0 : i32
    %c0_i32_0 = arith.constant 0 : i32
    %c0_i32_1 = arith.constant 0 : i32
    return %arg0, %c0_i32, %c0_i32_0 : i32, i32, i32
  }
}

</mosaic_0001>

<llo_original>
// kernel: apply.1
$region0: #{apply.1}
  #allocation0 [shape = 'u32[]', space=smem, size = 0x4, offset = 0x4, fixed_abs, tag = 'smem constant byte address 0x4 - core index']
  #allocation1 [shape = 'u32[144,128]{1,0:T(1,128)}', space=vmem, size = 0x12000, scoped, tag = 'internal scratch']
  %s0 = inlined_call_operand.vmem [shape: f32[2,32,256], index: 0, kind: input, shape index: {}]
  %s1 = inlined_call_operand.vmem [shape: f32[72,128], index: 1, kind: input, shape index: {}]
  %s2 = inlined_call_operand.vmem [shape: f32[2,32,256], index: 2, kind: output, shape index: {}]
  %s3 = sld [smem:[#allocation0]]
  $region41: #{apply.1} parent=0
    _
  %s5 = ssub.s32 1, %s3
  %s6 = scalar_select 0, %s5, %s3
  loop: start=0, step=1, limit=4
  $region2: #{apply.1} parent=0 // loop_pre_header
    _
  $region3: #{apply.1} parent=0 // loop_header
    %s8 = sphi 0, %s12
    %p9 = scmp.ge.s32.totalorder %s8, 4
    %s18 = sphi 0, %s20
    %s21 = sphi 0, %s18
    %s22 = sphi 0, %s21
    %s38 = sphi 0, %s22
    %s42 = sphi 0, %s42
    %s44 = sphi 0, %s42
    %s45 = sphi 0, %s44
    %s59 = sphi 0, %s45
    %s65 = sphi 0, %s67
    %s68 = sphi 0, %s65
    %s69 = sphi 0, %s68
    %s85 = sphi 0, %s69
  $region4: #{apply.1} parent=0 // loop_header_branch
    %11 = sbr.rel (%p9) target = $region8
  $region5: #{apply.1} parent=0 // loop_body
    %s13 = ssub.s32 %s8, 1
    %s14 = ssub.s32 %s8, 2
    %s15 = sadd.s32 %s8, 1
    %s16 = ssub.s32 %s8, %s15
    %p17 = scmp.eq.s32.totalorder %s16, 0
    %s19 = sadd.s32 %s18, 1
    %s20 = scalar_select %p17, %s18, %s19
    %p23 = pneg %p17
    %p24 = scmp.eq.s32.totalorder %s8, 1
    %p25 = por %p23, %p24
    %p26 = scmp.ne.s32.totalorder %s18, %s21
    %p27 = scmp.eq.s32.totalorder %s8, 0
    %p28 = por %p26, %p27
    %p29 = scmp.ne.s32.totalorder %s18, %s21
    %p30 = scmp.eq.s32.totalorder %s13, 1
    %p31 = por %p29, %p30
    %p32 = scmp.ne.s32.totalorder %s21, %s22
    %p33 = scmp.eq.s32.totalorder %s13, 0
    %p34 = por %p32, %p33
    %p35 = scmp.ne.s32.totalorder %s21, %s22
    %p36 = scmp.eq.s32.totalorder %s14, 1
    %p37 = por %p35, %p36
    %p39 = scmp.ne.s32.totalorder %s22, %s38
    %p40 = scmp.eq.s32.totalorder %s14, 0
    %p41 = por %p39, %p40
    %s43 = sadd.s32 %s42, 1
    %p46 = scmp.eq.s32.totalorder %s8, 1
    %p47 = scmp.ne.s32.totalorder %s42, %s44
    %p48 = scmp.eq.s32.totalorder %s8, 0
    %p49 = por %p47, %p48
    %p50 = scmp.ne.s32.totalorder %s42, %s44
    %p51 = scmp.eq.s32.totalorder %s13, 1
    %p52 = por %p50, %p51
    %p53 = scmp.ne.s32.totalorder %s44, %s45
    %p54 = scmp.eq.s32.totalorder %s13, 0
    %p55 = por %p53, %p54
    %p56 = scmp.ne.s32.totalorder %s44, %s45
    %p57 = scmp.eq.s32.totalorder %s14, 1
    %p58 = por %p56, %p57
    %p60 = scmp.ne.s32.totalorder %s45, %s59
    %p61 = scmp.eq.s32.totalorder %s14, 0
    %p62 = por %p60, %p61
    %s63 = ssub.s32 %s8, %s15
    %p64 = scmp.eq.s32.totalorder %s63, 0
    %s66 = sadd.s32 %s65, 1
    %s67 = scalar_select %p64, %s65, %s66
    %p70 = pneg %p64
    %p71 = scmp.eq.s32.totalorder %s8, 1
    %p72 = por %p70, %p71
    %p73 = scmp.ne.s32.totalorder %s65, %s68
    %p74 = scmp.eq.s32.totalorder %s8, 0
    %p75 = por %p73, %p74
    %p76 = scmp.ne.s32.totalorder %s65, %s68
    %p77 = scmp.eq.s32.totalorder %s13, 1
    %p78 = por %p76, %p77
    %p79 = scmp.ne.s32.totalorder %s68, %s69
    %p80 = scmp.eq.s32.totalorder %s13, 0
    %p81 = por %p79, %p80
    %p82 = scmp.ne.s32.totalorder %s68, %s69
    %p83 = scmp.eq.s32.totalorder %s14, 1
    %p84 = por %p82, %p83
    %p86 = scmp.ne.s32.totalorder %s69, %s85
    %p87 = scmp.eq.s32.totalorder %s14, 0
    %p88 = por %p86, %p87
    %p89 = scmp.le.s32.totalorder 1, %s8
    %p90 = scmp.lt.s32.totalorder %s8, 3
    %p91 = pnand %p89, %p90
    %p92 = pneg %p91
    // Predicated region
    $region9: #{apply.1} parent=5 // pred_check
      _
    $region10: #{apply.1} parent=5 // pred_check_branch
      %94 = sbr.rel (%p91) target = $region12
    $region11: #{apply.1} parent=5 // pred_region
      %s95 = ssub.s32 %s8, 1
      // Predicated region
      $region13: #{apply.1} parent=11 // pred_check
        %p96 = pneg %p55
      $region14: #{apply.1} parent=11 // pred_check_branch
        %98 = sbr.rel (%p96) target = $region16
      $region15: #{apply.1} parent=11 // pred_region
        _
      $region16: #{apply.1} parent=11 // pred_fallthru
        _
    $region12: #{apply.1} parent=5 // pred_fallthru
      _
    %p99 = scmp.lt.s32.totalorder %s8, 2
    // Predicated region
    $region17: #{apply.1} parent=5 // pred_check
      %p100 = pneg %p99
    $region18: #{apply.1} parent=5 // pred_check_branch
      %102 = sbr.rel (%p100) target = $region20
    $region19: #{apply.1} parent=5 // pred_region
      // Predicated region
      $region21: #{apply.1} parent=19 // pred_check
        %p103 = pneg %p28
      $region22: #{apply.1} parent=19 // pred_check_branch
        %105 = sbr.rel (%p103) target = $region24
      $region23: #{apply.1} parent=19 // pred_region
        %p106 = scmp.lt.s32.totalorder %s8, 1
        %s107 = scalar_select %p106, %s8, 1
        %s108 = smul.addr %s107, 8
        %s109 = smul.addr %s108, 8
        %s110 = scalar_lea.vmem %s0, %s109
      $region24: #{apply.1} parent=19 // pred_fallthru
        _
    $region20: #{apply.1} parent=5 // pred_fallthru
      _
    %p111 = scmp.le.s32.totalorder 1, %s8
    %p112 = scmp.lt.s32.totalorder %s8, 3
    %p113 = pnand %p111, %p112
    %p114 = pneg %p113
    // Predicated region
    $region25: #{apply.1} parent=5 // pred_check
      _
    $region26: #{apply.1} parent=5 // pred_check_branch
      %116 = sbr.rel (%p113) target = $region28
    $region27: #{apply.1} parent=5 // pred_region
      %s117 = ssub.s32 %s8, 1
      %p118 = scmp.lt.s32.totalorder %s13, 1
      %s119 = scalar_select %p118, %s13, 1
      %s120 = smul.addr %s119, 8
      %s121 = smul.addr %s120, 8
      %s122 = scalar_lea.vmem %s0, %s121
      %p123 = pneg %p34
      %p124 = pneg %p31
      %p125 = pneg %p55
      %p126 = pneg %p52
      %p127 = pneg %p81
      %p128 = pneg %p78
      %p129 = scmp.lt.s32.totalorder %s13, 1
      %s130 = scalar_select %p129, %s13, 1
      %s131 = smul.addr %s130, 8
      %s132 = smul.addr %s131, 8
      %s133 = scalar_lea.vmem %s2, %s132
      %p134 = scmp.lt.s32.totalorder %s13, 1
      %s135 = scalar_select %p134, %s13, 1
      %s136 = smul.addr %s135, 8
      %s137 = smul.addr %s136, 8
      %s138 = scalar_lea.vmem %s0, %s137
      %p139 = scmp.lt.s32.totalorder %s13, 1
      %s140 = scalar_select %p139, %s13, 1
      %s141 = smul.addr %s140, 8
      %s142 = smul.addr %s141, 8
      %s143 = scalar_lea.vmem %s2, %s142
      %v144 = vld [vmem:[%s138] sm:$0xff]
      %v145 = vld [vmem:[%s138 + $0x8] sm:$0xff]
      %v146 = vld [vmem:[%s138 + $0x10] sm:$0xff]
      %v147 = vld [vmem:[%s138 + $0x18] sm:$0xff]
      %v148 = vld [vmem:[%s138 + $0x20] sm:$0xff]
      %v149 = vld [vmem:[%s138 + $0x28] sm:$0xff]
      %v150 = vld [vmem:[%s138 + $0x30] sm:$0xff]
      %v151 = vld [vmem:[%s138 + $0x38] sm:$0xff]
      %v152 = vld [vmem:[%s1] sm:$0xff]
      %v153 = vld [vmem:[%s1 + $0x8] sm:$0xff]
      %v154 = vld [vmem:[%s1 + $0x10] sm:$0xff]
      %v155 = vld [vmem:[%s1 + $0x18] sm:$0xff]
      %v156 = vld [vmem:[%s1 + $0x20] sm:$0xff]
      %v157 = vld [vmem:[%s1 + $0x28] sm:$0xff]
      %v158 = vld [vmem:[%s1 + $0x30] sm:$0xff]
      %v159 = vld [vmem:[%s1 + $0x38] sm:$0xff]
      %v160 = vld [vmem:[%s1 + $0x40] sm:$0xff]
      %v161 = vadd.f32 %v144, %v145
      %162 = vadd.xlane.f32.xlu0 %v161
      %v163 = vpop.xlane.xlu0 %162
      %v164 = vadd.f32 %v146, %v147
      %165 = vadd.xlane.f32.xlu0 %v164
      %v166 = vpop.xlane.xlu0 %165
      %v167 = vadd.f32 %v148, %v149
      %168 = vadd.xlane.f32.xlu0 %v167
      %v169 = vpop.xlane.xlu0 %168
      %v170 = vadd.f32 %v150, %v151
      %171 = vadd.xlane.f32.xlu0 %v170
      %v172 = vpop.xlane.xlu0 %171
      %v173 = vmul.f32 %v163, 0.00390625
      %v174 = vmul.f32 %v166, 0.00390625
      %v175 = vmul.f32 %v169, 0.00390625
      %v176 = vmul.f32 %v172, 0.00390625
      %v177 = vmax.f32 %v144, %v145
      %178 = vmax.xlane.f32.xlu0 %v177
      %v179 = vpop.xlane.xlu0 %178
      %v180 = vmax.f32 %v146, %v147
      %181 = vmax.xlane.f32.xlu0 %v180
      %v182 = vpop.xlane.xlu0 %181
      %v183 = vmax.f32 %v148, %v149
      %184 = vmax.xlane.f32.xlu0 %v183
      %v185 = vpop.xlane.xlu0 %184
      %v186 = vmax.f32 %v150, %v151
      %187 = vmax.xlane.f32.xlu0 %v186
      %v188 = vpop.xlane.xlu0 %187
      %v189 = vmul.f32 %v152, %v173
      %v190 = vmul.f32 %v153, %v174
      %v191 = vmul.f32 %v154, %v175
      %v192 = vmul.f32 %v155, %v176
      %v193 = vadd.f32 %v189, %v190
      %v194 = vadd.f32 %v193, %v191
      %v195 = vadd.f32 %v194, %v192
      %v196 = vrot.slane %v195, 4
      %v197 = vadd.f32 %v195, %v196
      %v198 = vrot.slane %v197, 2
      %v199 = vadd.f32 %v197, %v198
      %v200 = vrot.slane %v199, 1
      %v201 = vadd.f32 %v199, %v200
      %v202 = vadd.f32 %v201, %v160
      %v203 = vmul.f32 %v152, %v179
      %v204 = vmul.f32 %v153, %v182
      %v205 = vmul.f32 %v154, %v185
      %v206 = vmul.f32 %v155, %v188
      %v207 = vadd.f32 %v203, %v204
      %v208 = vadd.f32 %v207, %v205
      %v209 = vadd.f32 %v208, %v206
      %v210 = vrot.slane %v209, 4
      %v211 = vadd.f32 %v209, %v210
      %v212 = vrot.slane %v211, 2
      %v213 = vadd.f32 %v211, %v212
      %v214 = vrot.slane %v213, 1
      %v215 = vadd.f32 %v213, %v214
      %v216 = vadd.f32 %v215, %v160
      %v217 = vmul.f32 %v202, 0.5
      %v218 = vmul.f32 %v202, 0.70710677
      %v219 = verf.f32.pop %v218
      %v220 = vadd.f32 %v219, 1.0
      %v221 = vmul.f32 %v217, %v220
      %v222 = vmul.f32 %v216, 0.5
      %v223 = vmul.f32 %v216, 0.70710677
      %v224 = verf.f32.pop %v223
      %v225 = vadd.f32 %v224, 1.0
      %v226 = vmul.f32 %v222, %v225
      %v227 = vadd.f32 %v221, %v226
      %v228 = vlaneseq
      %v229 = vand.u32 %v228, 127
      %vm230 = vcmp.eq.s32.totalorder %v229, 2
      %v231 = vsel %vm230, 2.0, %v227
      %v232 = vlaneseq
      %v233 = vshrl.u32 %v232, 7
      %v234 = vsub.s32 0, %v233
      %v235 = vrot.slane %v231, %v234
      %v236 = vmul.f32 %v156, %v235
      %v237 = vmul.f32 %v157, %v235
      %v238 = vmul.f32 %v158, %v235
      %v239 = vmul.f32 %v159, %v235
      %240 = vadd.xlane.f32.xlu0 %v236
      %v241 = vpop.xlane.xlu0 %240
      %242 = vadd.xlane.f32.xlu0 %v237
      %v243 = vpop.xlane.xlu0 %242
      %244 = vadd.xlane.f32.xlu0 %v238
      %v245 = vpop.xlane.xlu0 %244
      %246 = vadd.xlane.f32.xlu0 %v239
      %v247 = vpop.xlane.xlu0 %246
      %v248 = vxor.u32 %v241, 2147483648
      %v249 = vxor.u32 %v243, 2147483648
      %v250 = vxor.u32 %v245, 2147483648
      %v251 = vxor.u32 %v247, 2147483648
      %v252 = vmul.f32 %v248, 1.442695
      %v253 = vpow.pop %v252
      %v254 = vmul.f32 %v249, 1.442695
      %v255 = vpow.pop %v254
      %v256 = vmul.f32 %v250, 1.442695
      %v257 = vpow.pop %v256
      %v258 = vmul.f32 %v251, 1.442695
      %v259 = vpow.pop %v258
      %v260 = vadd.f32 %v253, 1.0
      %v261 = vadd.f32 %v255, 1.0
      %v262 = vadd.f32 %v257, 1.0
      %v263 = vadd.f32 %v259, 1.0
      %v264 = vrcp.pop %v260
      %v265 = vmul.f32 1.0, %v264
      %v266 = vrcp.pop %v261
      %v267 = vmul.f32 1.0, %v266
      %v268 = vrcp.pop %v262
      %v269 = vmul.f32 1.0, %v268
      %v270 = vrcp.pop %v263
      %v271 = vmul.f32 1.0, %v270
      %v272 = vmul.f32 %v144, %v265
      %v273 = vmul.f32 %v145, %v265
      %v274 = vmul.f32 %v146, %v267
      %v275 = vmul.f32 %v147, %v267
      %v276 = vmul.f32 %v148, %v269
      %v277 = vmul.f32 %v149, %v269
      %v278 = vmul.f32 %v150, %v271
      %v279 = vmul.f32 %v151, %v271
      %280 = vst [vmem:[%s143] sm:$0xff] %v272
      %281 = vst [vmem:[%s143 + $0x8] sm:$0xff] %v273
      %282 = vst [vmem:[%s143 + $0x10] sm:$0xff] %v274
      %283 = vst [vmem:[%s143 + $0x18] sm:$0xff] %v275
      %284 = vst [vmem:[%s143 + $0x20] sm:$0xff] %v276
      %285 = vst [vmem:[%s143 + $0x28] sm:$0xff] %v277
      %286 = vst [vmem:[%s143 + $0x30] sm:$0xff] %v278
      %287 = vst [vmem:[%s143 + $0x38] sm:$0xff] %v279
      %p288 = scmp.lt.s32.totalorder %s13, 1
      %s289 = scalar_select %p288, %s13, 1
      %s290 = smul.addr %s289, 8
      %s291 = smul.addr %s290, 8
      %s292 = scalar_lea.vmem %s2, %s291
      // Predicated region
      $region29: #{apply.1} parent=27 // pred_check
        %p293 = pneg %p78
      $region30: #{apply.1} parent=27 // pred_check_branch
        %295 = sbr.rel (%p293) target = $region32
      $region31: #{apply.1} parent=27 // pred_region
        _
      $region32: #{apply.1} parent=27 // pred_fallthru
        _
    $region28: #{apply.1} parent=5 // pred_fallthru
      _
    %p296 = scmp.le.s32.totalorder 2, %s8
    // Predicated region
    $region33: #{apply.1} parent=5 // pred_check
      %p297 = pneg %p296
    $region34: #{apply.1} parent=5 // pred_check_branch
      %299 = sbr.rel (%p297) target = $region36
    $region35: #{apply.1} parent=5 // pred_region
      %s300 = ssub.s32 %s8, 2
      // Predicated region
      $region37: #{apply.1} parent=35 // pred_check
        %p301 = pneg %p84
      $region38: #{apply.1} parent=35 // pred_check_branch
        %303 = sbr.rel (%p301) target = $region40
      $region39: #{apply.1} parent=35 // pred_region
        %p304 = scmp.lt.s32.totalorder %s14, 1
        %s305 = scalar_select %p304, %s14, 1
        %s306 = smul.addr %s305, 8
        %s307 = smul.addr %s306, 8
        %s308 = scalar_lea.vmem %s2, %s307
      $region40: #{apply.1} parent=35 // pred_fallthru
        _
    $region36: #{apply.1} parent=5 // pred_fallthru
      _
  $region6: #{apply.1} parent=0 // loop_footer
    %s12 = sadd.s32 1, %s8
  $region7: #{apply.1} parent=0 // loop_footer_branch
    %7 = sbr.rel target = $region3
  $region8: #{apply.1} parent=0 // loop_exit
    _

</llo_original>
